<compile_context>
chip_gen: v6e
topology: v6e:2x2x1
jax: 0.10.0
libtpu: 0.0.40
codegen_flags: <defaults>
</compile_context>

<pallas_src>
import functools

import jax
import jax.numpy as jnp
from jax.experimental import pallas as pl
from jax.experimental.pallas import tpu as pltpu

_LANE = 128
_MAX_BLOCK_N = 4096  # max lanes per output block (2*B*4096*4 bytes per buffer)


def _mix32(x):
    """splitmix32-style 32-bit finalizer; x is uint32, returns uint32."""
    x = x ^ (x >> 16)
    x = x * jnp.uint32(0x7FEB352D)
    x = x ^ (x >> 15)
    x = x * jnp.uint32(0x846CA68B)
    x = x ^ (x >> 16)
    return x


def _point_sampler_kernel(seed_ref, out_ref, *, h, w, n_pad_total):
    # seed_ref: SMEM (1,) int32
    # out_ref:  VMEM (2, B, BLOCK_N) int32 block of the (2, B, N_pad) slab;
    #           out[0] = rows in [0, h), out[1] = cols in [0, w).
    _, bsz, blk_n = out_ref.shape
    n0 = pl.program_id(0) * blk_n

    # Global linear counter for every element of this block, offset by the
    # (golden-ratio scaled) seed.  Pure function of index -> grid-safe.
    b_iota = jax.lax.broadcasted_iota(jnp.int32, (bsz, blk_n), 0)
    n_iota = jax.lax.broadcasted_iota(jnp.int32, (bsz, blk_n), 1) + n0
    golden = jnp.int32(-1640531527)  # 0x9E3779B9 as two's-complement int32
    ctr = (b_iota * n_pad_total + n_iota + seed_ref[0] * golden).astype(jnp.uint32)

    inv23 = jnp.float32(1.0 / (1 << 23))

    # Row channel: counter stream [0, B*N_pad).  23 high-quality bits -> [0,1).
    r_bits = _mix32(ctr)
    u_row = (r_bits >> 9).astype(jnp.int32).astype(jnp.float32) * inv23
    out_ref[0, ...] = (u_row * jnp.float32(h)).astype(jnp.int32)

    # Col channel: disjoint counter stream [B*N_pad, 2*B*N_pad).
    c_bits = _mix32(ctr + jnp.uint32(bsz * n_pad_total))
    u_col = (c_bits >> 9).astype(jnp.int32).astype(jnp.float32) * inv23
    out_ref[1, ...] = (u_col * jnp.float32(w)).astype(jnp.int32)


def _round_up(x, m):
    return ((x + m - 1) // m) * m


def point_sampler_pts_slab(b, num_points, h, w, seed):
    """Coordinate-major result: (2, b, num_points) int32; slab[0]=rows, slab[1]=cols.

    Prefer consuming this slab downstream -- it avoids transposing into the
    lane-hostile (b, N, 2) layout entirely.
    """
    n_pad = _round_up(max(int(num_points), 1), _LANE)
    block_n = min(n_pad, _MAX_BLOCK_N)
    n_pad = _round_up(n_pad, block_n)
    grid_n = n_pad // block_n

    seed_arr = jnp.asarray(seed, dtype=jnp.int32).reshape((1,))
    kernel = functools.partial(
        _point_sampler_kernel, h=float(h), w=float(w), n_pad_total=n_pad
    )

    slab = pl.pallas_call(
        kernel,
        out_shape=jax.ShapeDtypeStruct((2, b, n_pad), jnp.int32),
        grid=(grid_n,),
        in_specs=[pl.BlockSpec(memory_space=pltpu.MemorySpace.SMEM)],
        out_specs=pl.BlockSpec((2, b, block_n), lambda i: (0, 0, i)),
    )(seed_arr)

    return slab[:, :, :num_points]


def point_sampler_forward(b, num_points, h, w, seed):
    """Pallas equivalent of PointSampler(num_points).forward(b, h, w) -> (b, N, 2)."""
    slab = point_sampler_pts_slab(b, num_points, h, w, seed)
    # Glue only: match the PyTorch (b, num_points, 2) convention.  For perf,
    # use point_sampler_pts_slab directly and skip this transpose.
    return jnp.transpose(slab, (1, 2, 0))


# TODO(synk): the reference module's _sample_pts is abstract; uniform random
# pixel sampling is the concrete behavior implemented here.


if __name__ == "__main__":
    # Small deterministic example consistent with forward(b, h, w).
    b, num_points, h, w = 2, 8, 16, 16

    key = jax.random.PRNGKey(0)
    seed = jax.random.randint(key, (), 0, 2**31 - 1, dtype=jnp.int32)

    pts = point_sampler_forward(b, num_points, h, w, seed)
    pts = jax.block_until_ready(pts)

    # Mirror the PyTorch forward's shape assertion + sanity range checks.
    assert pts.shape == (b, num_points, 2), pts.shape
    assert pts.dtype == jnp.int32
    assert bool(jnp.all(pts[..., 0] >= 0)) and bool(jnp.all(pts[..., 0] < h))
    assert bool(jnp.all(pts[..., 1] >= 0)) and bool(jnp.all(pts[..., 1] < w))

    print("KERNEL_OK")
</pallas_src>

<mosaic_0001>
module attributes {stable_mosaic.version = 11 : i64} {
  func.func @_point_sampler_kernel(%arg0: i32, %arg1: memref<1xi32, #tpu.memory_space<smem>>, %arg2: memref<2x2x128xi32, #tpu.memory_space<vmem>>) attributes {dimension_semantics = [#tpu.dimension_semantics<arbitrary>], iteration_bounds = array<i64: 1>, scalar_prefetch = 0 : i64, scratch_operands = 0 : i64, tpu.core_type = #tpu.core_type<tc>, window_params = [{transform_indices = @transform_0, window_bounds = array<i64: 1>}, {transform_indices = @transform_1, window_bounds = array<i64: 2, 2, 128>}]} {
    %c128_i32 = arith.constant 128 : i32
    %0 = arith.muli %arg0, %c128_i32 : i32
    %1 = tpu.iota {dimensions = array<i32: 0>} : vector<2x128xi32>
    %2 = tpu.iota {dimensions = array<i32: 1>} : vector<2x128xi32>
    %3 = vector.broadcast %0 : i32 to vector<2x128xi32>
    %4 = arith.addi %2, %3 : vector<2x128xi32>
    %c128_i32_0 = arith.constant 128 : i32
    %5 = vector.broadcast %c128_i32_0 : i32 to vector<2x128xi32>
    %6 = arith.muli %1, %5 : vector<2x128xi32>
    %7 = arith.addi %6, %4 : vector<2x128xi32>
    %c0 = arith.constant 0 : index
    %8 = memref.load %arg1[%c0] : memref<1xi32, #tpu.memory_space<smem>>
    %c-1640531527_i32 = arith.constant -1640531527 : i32
    %9 = arith.muli %8, %c-1640531527_i32 : i32
    %10 = vector.broadcast %9 : i32 to vector<2x128xi32>
    %11 = arith.addi %7, %10 : vector<2x128xi32>
    %c16_i32 = arith.constant 16 : i32
    %12 = vector.broadcast %c16_i32 : i32 to vector<2x128xi32>
    %13 = arith.shrui %11, %12 : vector<2x128xi32>
    %14 = arith.xori %11, %13 : vector<2x128xi32>
    %c2146121005_i32 = arith.constant 2146121005 : i32
    %15 = vector.broadcast %c2146121005_i32 : i32 to vector<2x128xi32>
    %16 = arith.muli %14, %15 : vector<2x128xi32>
    %c15_i32 = arith.constant 15 : i32
    %17 = vector.broadcast %c15_i32 : i32 to vector<2x128xi32>
    %18 = arith.shrui %16, %17 : vector<2x128xi32>
    %19 = arith.xori %16, %18 : vector<2x128xi32>
    %c-2073254261_i32 = arith.constant -2073254261 : i32
    %20 = vector.broadcast %c-2073254261_i32 : i32 to vector<2x128xi32>
    %21 = arith.muli %19, %20 : vector<2x128xi32>
    %c16_i32_1 = arith.constant 16 : i32
    %22 = vector.broadcast %c16_i32_1 : i32 to vector<2x128xi32>
    %23 = arith.shrui %21, %22 : vector<2x128xi32>
    %24 = arith.xori %21, %23 : vector<2x128xi32>
    %c9_i32 = arith.constant 9 : i32
    %25 = vector.broadcast %c9_i32 : i32 to vector<2x128xi32>
    %26 = arith.shrui %24, %25 : vector<2x128xi32>
    %27 = arith.sitofp %26 : vector<2x128xi32> to vector<2x128xf32>
    %cst = arith.constant 1.1920929E-7 : f32
    %28 = vector.broadcast %cst : f32 to vector<2x128xf32>
    %29 = arith.mulf %27, %28 : vector<2x128xf32>
    %cst_2 = arith.constant 1.600000e+01 : f32
    %30 = vector.broadcast %cst_2 : f32 to vector<2x128xf32>
    %31 = arith.mulf %29, %30 : vector<2x128xf32>
    %32 = arith.fptosi %31 : vector<2x128xf32> to vector<2x128xi32>
    %c0_3 = arith.constant 0 : index
    %c0_4 = arith.constant 0 : index
    %c0_5 = arith.constant 0 : index
    %33 = vector.load %arg2[%c0_3, %c0_4, %c0_5] : memref<2x2x128xi32, #tpu.memory_space<vmem>>, vector<1x2x128xi32>
    %34 = vector.shape_cast %33 : vector<1x2x128xi32> to vector<2x128xi32>
    %35 = vector.shape_cast %32 : vector<2x128xi32> to vector<1x2x128xi32>
    tpu.vector_store %arg2[%c0_3, %c0_4, %c0_5], %35 {strides = array<i32>} : memref<2x2x128xi32, #tpu.memory_space<vmem>>, vector<1x2x128xi32>,
    %c256_i32 = arith.constant 256 : i32
    %36 = vector.broadcast %c256_i32 : i32 to vector<2x128xi32>
    %37 = arith.addi %11, %36 : vector<2x128xi32>
    %c16_i32_6 = arith.constant 16 : i32
    %38 = vector.broadcast %c16_i32_6 : i32 to vector<2x128xi32>
    %39 = arith.shrui %37, %38 : vector<2x128xi32>
    %40 = arith.xori %37, %39 : vector<2x128xi32>
    %c2146121005_i32_7 = arith.constant 2146121005 : i32
    %41 = vector.broadcast %c2146121005_i32_7 : i32 to vector<2x128xi32>
    %42 = arith.muli %40, %41 : vector<2x128xi32>
    %c15_i32_8 = arith.constant 15 : i32
    %43 = vector.broadcast %c15_i32_8 : i32 to vector<2x128xi32>
    %44 = arith.shrui %42, %43 : vector<2x128xi32>
    %45 = arith.xori %42, %44 : vector<2x128xi32>
    %c-2073254261_i32_9 = arith.constant -2073254261 : i32
    %46 = vector.broadcast %c-2073254261_i32_9 : i32 to vector<2x128xi32>
    %47 = arith.muli %45, %46 : vector<2x128xi32>
    %c16_i32_10 = arith.constant 16 : i32
    %48 = vector.broadcast %c16_i32_10 : i32 to vector<2x128xi32>
    %49 = arith.shrui %47, %48 : vector<2x128xi32>
    %50 = arith.xori %47, %49 : vector<2x128xi32>
    %c9_i32_11 = arith.constant 9 : i32
    %51 = vector.broadcast %c9_i32_11 : i32 to vector<2x128xi32>
    %52 = arith.shrui %50, %51 : vector<2x128xi32>
    %53 = arith.sitofp %52 : vector<2x128xi32> to vector<2x128xf32>
    %cst_12 = arith.constant 1.1920929E-7 : f32
    %54 = vector.broadcast %cst_12 : f32 to vector<2x128xf32>
    %55 = arith.mulf %53, %54 : vector<2x128xf32>
    %cst_13 = arith.constant 1.600000e+01 : f32
    %56 = vector.broadcast %cst_13 : f32 to vector<2x128xf32>
    %57 = arith.mulf %55, %56 : vector<2x128xf32>
    %58 = arith.fptosi %57 : vector<2x128xf32> to vector<2x128xi32>
    %c1 = arith.constant 1 : index
    %c0_14 = arith.constant 0 : index
    %c0_15 = arith.constant 0 : index
    %59 = vector.load %arg2[%c1, %c0_14, %c0_15] : memref<2x2x128xi32, #tpu.memory_space<vmem>>, vector<1x2x128xi32>
    %60 = vector.shape_cast %59 : vector<1x2x128xi32> to vector<2x128xi32>
    %61 = vector.shape_cast %58 : vector<2x128xi32> to vector<1x2x128xi32>
    tpu.vector_store %arg2[%c1, %c0_14, %c0_15], %61 {strides = array<i32>} : memref<2x2x128xi32, #tpu.memory_space<vmem>>, vector<1x2x128xi32>,
    return
  }
  func.func @transform_0(%arg0: i32) -> i32 {
    %c0_i32 = arith.constant 0 : i32
    %c0_i32_0 = arith.constant 0 : i32
    return %c0_i32 : i32
  }
  func.func @transform_1(%arg0: i32) -> (i32, i32, i32) {
    %c0_i32 = arith.constant 0 : i32
    %c0_i32_0 = arith.constant 0 : i32
    %c0_i32_1 = arith.constant 0 : i32
    return %c0_i32, %c0_i32_0, %arg0 : i32, i32, i32
  }
}

</mosaic_0001>

<llo_original>
// kernel: tpu_custom_call.1
$region0: #{tpu_custom_call.1}
  #allocation0 [shape = 'u32[]', space=smem, size = 0x4, offset = 0x4, fixed_abs, tag = 'smem constant byte address 0x4 - core index']
  #allocation1 [shape = 'u32[144,128]{1,0:T(1,128)}', space=vmem, size = 0x12000, scoped, tag = 'internal scratch']
  #allocation2 [shape = 's32[1]{0:T(128)S(6)}', space=smem, size = 0x200, scoped, tag = 'scoped memory for tpu_custom_call.1']
  %s0 = inlined_call_operand.<no memory space> [shape: s32[1], index: 0, kind: input, shape index: {}]
  %s1 = inlined_call_operand.hbm [shape: s32[2,2,128], index: 1, kind: output, shape index: {}]
  %s2 = sld [smem:[#allocation0]]
  $region14: #{tpu_custom_call.1} parent=0
    _
  %s4 = ssub.s32 1, %s2
  %s5 = scalar_select 0, %s4, %s2
  %6 = sst [smem:[#allocation2]] %s0
  $region1: #{tpu_custom_call.1} parent=0
    #allocation3 [shape = 'u8[2048]{0}', space=vmem, size = 0x800, scoped, tag = 'output window, operand 0, single buffered']
    #allocation4 [shape = 's32[1]{0}', space=sflag, size = 0x4, scoped, tag = 'scoped memory for tpu_custom_call.1']
    %7 = vsyncpa [#allocation4], 0
    // Predicated region
    $region2: #{tpu_custom_call.1} parent=1 // pred_check
      _
    $region3: #{tpu_custom_call.1} parent=1 // pred_check_branch
      %9 = sbr.rel (0) target = $region5
    $region4: #{tpu_custom_call.1} parent=1 // pred_region
      _
    $region5: #{tpu_custom_call.1} parent=1 // pred_fallthru
      _
    %s10 = smul.u32 0, 128
    %v11 = vlaneseq
    %v12 = vshrl.u32 %v11, 7
    %v13 = vlaneseq
    %v14 = vand.u32 %v13, 127
    %v15 = vstv %s10
    %v16 = vadd.s32 %v14, %v15
    %v17 = vmul.u32 %v12, 128
    %v18 = vadd.s32 %v17, %v16
    %s19 = sld [smem:[#allocation2]]
    %s20 = smul.u32 %s19, 2654435769
    %v21 = vstv %s20
    %v22 = vadd.s32 %v18, %v21
    %v23 = vshrl.u32 %v22, 16
    %v24 = vxor.u32 %v22, %v23
    %v25 = vmul.u32 %v24, 2146121005
    %v26 = vshrl.u32 %v25, 15
    %v27 = vxor.u32 %v25, %v26
    %v28 = vmul.u32 %v27, 2221713035
    %v29 = vshrl.u32 %v28, 16
    %v30 = vxor.u32 %v28, %v29
    %v31 = vshrl.u32 %v30, 9
    %v32 = vcvt.s32.f32 %v31
    %v33 = vmul.f32 %v32, 1.1920929e-07
    %v34 = vmul.f32 %v33, 16.0
    %v35 = vcvt.f32.s32.to.zero.pseudo %v34
    %36 = vst [vmem:[#allocation3] sm:$0x3] %v35
    %v37 = vadd.s32 %v22, 256
    %v38 = vshrl.u32 %v37, 16
    %v39 = vxor.u32 %v37, %v38
    %v40 = vmul.u32 %v39, 2146121005
    %v41 = vshrl.u32 %v40, 15
    %v42 = vxor.u32 %v40, %v41
    %v43 = vmul.u32 %v42, 2221713035
    %v44 = vshrl.u32 %v43, 16
    %v45 = vxor.u32 %v43, %v44
    %v46 = vshrl.u32 %v45, 9
    %v47 = vcvt.s32.f32 %v46
    %v48 = vmul.f32 %v47, 1.1920929e-07
    %v49 = vmul.f32 %v48, 16.0
    %v50 = vcvt.f32.s32.to.zero.pseudo %v49
    %s51 = scalar_lea.vmem [#allocation3], 2
    %52 = vst [vmem:[%s51] sm:$0x3] %v50
    // Predicated region
    $region6: #{tpu_custom_call.1} parent=1 // pred_check
      _
    $region7: #{tpu_custom_call.1} parent=1 // pred_check_branch
      %54 = sbr.rel (0) target = $region9
    $region8: #{tpu_custom_call.1} parent=1 // pred_region
      %s56 = ssub.s32 64, 64
      %57 = vsyncadd [#allocation4], %s56
      %s58 = sshll.u32 [#allocation3], 4
      %s59 = int_to_ptr.vmem [resolvable:$true] %s58
      %64 = dma.vmem_to_hbm [thread:$0]  %s59, 64, %s1, [#allocation4], 32, 32, 2
    $region9: #{tpu_custom_call.1} parent=1 // pred_fallthru
      _
    // Predicated region
    $region10: #{tpu_custom_call.1} parent=1 // pred_check
      _
    $region11: #{tpu_custom_call.1} parent=1 // pred_check_branch
      %66 = sbr.rel (0) target = $region13
    $region12: #{tpu_custom_call.1} parent=1 // pred_region
      %67 = dma.done [#allocation4], 64
    $region13: #{tpu_custom_call.1} parent=1 // pred_fallthru
      _
    %68 = vsyncpa [#allocation4], 1

</llo_original>
